<compile_context>
chip_gen: v7x
topology: tpu7x:2x2x1
jax: 0.10.0
libtpu: 0.0.40
codegen_flags: <defaults>
</compile_context>

<pallas_src>
import functools
from typing import NamedTuple, Tuple

import jax
import jax.numpy as jnp
from jax.experimental import pallas as pl
from jax.experimental.pallas import tpu as pltpu


def _round_up(x: int, m: int) -> int:
    return ((x + m - 1) // m) * m


class ParamLayout(NamedTuple):
    # per layer: (row_offset, fan_in, fan_out); W^T lives at [row:row+fan_out, 0:fan_in],
    # bias (as a column) at [row:row+fan_out, fan_in].
    offs: Tuple[Tuple[int, int, int], ...]
    rows: int
    cols: int
    state_size: int
    action_size: int


def make_layout(state_size: int, action_size: int) -> ParamLayout:
    S, A = state_size, action_size
    dims = [(S, 2 * S), (2 * S, 2 * A), (2 * A, A)]
    cols = _round_up(max(fi for fi, _ in dims) + 1, 128)  # fan_in weight cols + 1 bias col, lane-padded
    offs = []
    row = 0
    for fan_in, fan_out in dims:
        offs.append((row, fan_in, fan_out))
        row = _round_up(row + fan_out, 8)  # keep every segment sublane-aligned
    rows = _round_up(row, 8)
    return ParamLayout(tuple(offs), rows, cols, S, A)


def init_params(key, state_size: int, action_size: int):
    """Deterministic init mimicking torch.nn.Linear (uniform(-1/sqrt(fan_in), 1/sqrt(fan_in)))."""
    dims = [
        (state_size, state_size * 2),
        (state_size * 2, action_size * 2),
        (action_size * 2, action_size),
    ]
    params = []
    for fan_in, fan_out in dims:
        key, kw, kb = jax.random.split(key, 3)
        bound = 1.0 / jnp.sqrt(float(fan_in))
        w = jax.random.uniform(kw, (fan_in, fan_out), jnp.float32, -bound, bound)  # x @ W orientation
        b = jax.random.uniform(kb, (fan_out,), jnp.float32, -bound, bound)
        params.extend([w, b])
    return tuple(params)


def pack_params(params, layout: ParamLayout):
    """Pack (w1,b1,w2,b2,w3,b3) transposed into one contiguous lane-padded f32 buffer -> single DMA."""
    packed = jnp.zeros((layout.rows, layout.cols), jnp.float32)
    for li, (w_off, fan_in, fan_out) in enumerate(layout.offs):
        w = params[2 * li]        # (fan_in, fan_out)
        b = params[2 * li + 1]    # (fan_out,)
        packed = packed.at[w_off:w_off + fan_out, 0:fan_in].set(w.T)   # W^T: (fan_out, fan_in)
        packed = packed.at[w_off:w_off + fan_out, fan_in].set(b)       # bias as a column
    return packed


def policy_nn_kernel(layout: ParamLayout, x_ref, p_ref, o_ref):
    # Feature-major: h is (features, tm) with the batch tile on the 128-lane axis.
    h = x_ref[...]
    if h.dtype != jnp.float32:
        h = h.astype(jnp.float32)

    # Three Linear+ReLU layers; weights/biases sliced from the single VMEM-resident packed
    # buffer with static offsets (no extra DMAs, no runtime indexing cost).
    for (w_off, fan_in, fan_out) in layout.offs:
        w = p_ref[w_off:w_off + fan_out, 0:fan_in]             # (fan_out, fan_in) = W^T
        b = p_ref[w_off:w_off + fan_out, fan_in:fan_in + 1]    # (fan_out, 1), broadcasts over lanes
        h = jnp.dot(w, h, preferred_element_type=jnp.float32) + b   # MXU: M=fan_out, K=fan_in, N=tm
        h = jnp.maximum(h, 0.0)

    # Numerically stable softmax over the feature (sublane) axis == torch Softmax(dim=1)
    # in the original batch-major layout. Exact divide (log-prob consumers downstream).
    m = jnp.max(h, axis=0, keepdims=True)
    e = jnp.exp(h - m)
    denom = jnp.sum(e, axis=0, keepdims=True)
    o_ref[...] = (e / denom).astype(o_ref.dtype)


def policy_nn_forward(x, packed_params, layout: ParamLayout, *, block_b: int = 8192):
    B, S = x.shape
    assert S == layout.state_size
    A = layout.action_size

    # Feature-major: batch on the lane axis -> lane-dense loads/stores, full vregs.
    xt = x.T                                            # (S, B)
    n_lanes = _round_up(max(B, 128), 128)               # lane-aligned padded batch
    tm = min(block_b, n_lanes)
    # v7x has 2 TensorCores: give the (parallel) batch grid >= 2 steps when there's enough work.
    if n_lanes // tm < 2 and n_lanes >= 512:
        tm = _round_up(n_lanes // 2, 128)
    B_pad = _round_up(n_lanes, tm)
    if B_pad != B:
        # Zero-padded batch columns produce finite (uniform) softmax columns and are sliced
        # away below, so no in-kernel masking is needed.
        xt = jnp.pad(xt, ((0, 0), (0, B_pad - B)))

    flops = 2 * B_pad * sum(fi * fo for (_, fi, fo) in layout.offs)
    bytes_accessed = 4 * (B_pad * S + layout.rows * layout.cols + B_pad * A)
    cost = pl.CostEstimate(flops=flops, transcendentals=B_pad * A, bytes_accessed=bytes_accessed)

    out = pl.pallas_call(
        functools.partial(policy_nn_kernel, layout),
        out_shape=jax.ShapeDtypeStruct((A, B_pad), jnp.float32),
        grid_spec=pltpu.PrefetchScalarGridSpec(
            num_scalar_prefetch=0,
            grid=(B_pad // tm,),
            in_specs=[
                pl.BlockSpec((S, tm), lambda i: (0, i)),                     # x tiles, pipelined
                # Constant index_map -> params DMA'd once and VMEM-resident across grid steps.
                # TODO(synk): pipeline_mode=pl.Buffered(1) would also drop the second 28 KiB
                # revolving buffer for this never-changing block (hygiene-level win only).
                pl.BlockSpec((layout.rows, layout.cols), lambda i: (0, 0)),
            ],
            out_specs=pl.BlockSpec((A, tm), lambda i: (0, i)),
        ),
        compiler_params=pltpu.CompilerParams(
            # Lets v7x shard the batch grid across its 2 TensorCores (no-op on v5e/v6e).
            dimension_semantics=("parallel",),
        ),
        cost_estimate=cost,
    )(xt, packed_params)

    # Back to the PyTorch (B, A) convention; the (A, B) result is tiny so this is negligible.
    return out[:, :B].T


def reference_forward(x, params):
    w1, b1, w2, b2, w3, b3 = params
    h = jnp.maximum(x @ w1 + b1, 0.0)
    h = jnp.maximum(h @ w2 + b2, 0.0)
    h = jnp.maximum(h @ w3 + b3, 0.0)
    return jax.nn.softmax(h, axis=1)


def policy_nn_apply(x, params, packed_params, layout: ParamLayout, *, min_pallas_batch=256):
    """Production entry: tiny acting-path batches go through plain fused XLA (launch + DMA
    latency cannot be amortized there); rollout-scale batches use the Pallas kernel."""
    if x.shape[0] < min_pallas_batch:
        return reference_forward(x, params)
    return policy_nn_forward(x, packed_params, layout)


if __name__ == "__main__":
    state_size = 16
    action_size = 8

    key = jax.random.PRNGKey(0)
    key, kp = jax.random.split(key)
    params = init_params(kp, state_size, action_size)
    layout = make_layout(state_size, action_size)
    packed = pack_params(params, layout)

    # Small acting-sized batch (single grid step) and a rollout-sized batch that exercises the
    # multi-step (2-core-friendly) grid path. Both go through the Pallas kernel here.
    for batch in (4, 1000):
        key, kx = jax.random.split(key)
        x = jax.random.normal(kx, (batch, state_size), jnp.float32)

        out = jax.block_until_ready(policy_nn_forward(x, packed, layout))
        ref = reference_forward(x, params)

        assert out.shape == (batch, action_size)
        assert jnp.allclose(out, ref, atol=1e-4, rtol=1e-4), "Pallas output mismatch vs reference"
        assert jnp.allclose(jnp.sum(out, axis=1), jnp.ones((batch,)), atol=1e-4)

    print("KERNEL_OK")
</pallas_src>

<mosaic_0001>
module attributes {stable_mosaic.version = 11 : i64} {
  func.func @policy_nn_kernel(%arg0: i32, %arg1: memref<16x128xf32, #tpu.memory_space<vmem>>, %arg2: memref<56x128xf32, #tpu.memory_space<vmem>>, %arg3: memref<8x128xf32, #tpu.memory_space<vmem>>) attributes {dimension_semantics = [#tpu.dimension_semantics<parallel>], iteration_bounds = array<i64: 1>, scalar_prefetch = 0 : i64, scratch_operands = 0 : i64, tpu.core_type = #tpu.core_type<tc>, window_params = [{transform_indices = @transform_0, window_bounds = array<i64: 16, 128>}, {pipeline_mode = #tpu.pipeline_mode<synchronous>, transform_indices = @transform_1, window_bounds = array<i64: 56, 128>}, {transform_indices = @transform_2, window_bounds = array<i64: 8, 128>}]} {
    %c0 = arith.constant 0 : index
    %c0_0 = arith.constant 0 : index
    %0 = vector.load %arg1[%c0, %c0_0] : memref<16x128xf32, #tpu.memory_space<vmem>>, vector<16x128xf32>
    %c0_1 = arith.constant 0 : index
    %c0_2 = arith.constant 0 : index
    %1 = vector.load %arg2[%c0_1, %c0_2] : memref<56x128xf32, #tpu.memory_space<vmem>>, vector<32x16xf32>
    %c0_3 = arith.constant 0 : index
    %c16 = arith.constant 16 : index
    %2 = vector.load %arg2[%c0_3, %c16] : memref<56x128xf32, #tpu.memory_space<vmem>>, vector<32x1xf32>
    %cst = arith.constant dense<0.000000e+00> : vector<32x128xf32>
    %3 = tpu.matmul %1, %0, %cst {dimension_numbers = #tpu.dot_dimension_numbers<[1], [0], [0], [1], [0, 0, 1, 1], [], []>} : vector<32x16xf32>, vector<16x128xf32>, vector<32x128xf32> -> vector<32x128xf32>
    %4 = vector.broadcast %2 : vector<32x1xf32> to vector<32x128xf32>
    %5 = arith.addf %3, %4 : vector<32x128xf32>
    %cst_4 = arith.constant 0.000000e+00 : f32
    %6 = vector.broadcast %cst_4 : f32 to vector<32x128xf32>
    %7 = arith.maximumf %5, %6 : vector<32x128xf32>
    %c32 = arith.constant 32 : index
    %c0_5 = arith.constant 0 : index
    %8 = vector.load %arg2[%c32, %c0_5] : memref<56x128xf32, #tpu.memory_space<vmem>>, vector<16x32xf32>
    %c32_6 = arith.constant 32 : index
    %c32_7 = arith.constant 32 : index
    %9 = vector.load %arg2[%c32_6, %c32_7] : memref<56x128xf32, #tpu.memory_space<vmem>>, vector<16x1xf32>
    %cst_8 = arith.constant dense<0.000000e+00> : vector<16x128xf32>
    %10 = tpu.matmul %8, %7, %cst_8 {dimension_numbers = #tpu.dot_dimension_numbers<[1], [0], [0], [1], [0, 0, 1, 1], [], []>} : vector<16x32xf32>, vector<32x128xf32>, vector<16x128xf32> -> vector<16x128xf32>
    %11 = vector.broadcast %9 : vector<16x1xf32> to vector<16x128xf32>
    %12 = arith.addf %10, %11 : vector<16x128xf32>
    %cst_9 = arith.constant 0.000000e+00 : f32
    %13 = vector.broadcast %cst_9 : f32 to vector<16x128xf32>
    %14 = arith.maximumf %12, %13 : vector<16x128xf32>
    %c48 = arith.constant 48 : index
    %c0_10 = arith.constant 0 : index
    %15 = vector.load %arg2[%c48, %c0_10] : memref<56x128xf32, #tpu.memory_space<vmem>>, vector<8x16xf32>
    %c48_11 = arith.constant 48 : index
    %c16_12 = arith.constant 16 : index
    %16 = vector.load %arg2[%c48_11, %c16_12] : memref<56x128xf32, #tpu.memory_space<vmem>>, vector<8x1xf32>
    %cst_13 = arith.constant dense<0.000000e+00> : vector<8x128xf32>
    %17 = tpu.matmul %15, %14, %cst_13 {dimension_numbers = #tpu.dot_dimension_numbers<[1], [0], [0], [1], [0, 0, 1, 1], [], []>} : vector<8x16xf32>, vector<16x128xf32>, vector<8x128xf32> -> vector<8x128xf32>
    %18 = vector.broadcast %16 : vector<8x1xf32> to vector<8x128xf32>
    %19 = arith.addf %17, %18 : vector<8x128xf32>
    %cst_14 = arith.constant 0.000000e+00 : f32
    %20 = vector.broadcast %cst_14 : f32 to vector<8x128xf32>
    %21 = arith.maximumf %19, %20 : vector<8x128xf32>
    %cst_15 = arith.constant dense<0xFF800000> : vector<128xf32>
    %22 = vector.multi_reduction <maximumf>, %21, %cst_15 [0] : vector<8x128xf32> to vector<128xf32>
    %23 = vector.shape_cast %22 : vector<128xf32> to vector<1x128xf32>
    %24 = vector.broadcast %23 : vector<1x128xf32> to vector<8x128xf32>
    %25 = arith.subf %21, %24 : vector<8x128xf32>
    %26 = math.exp %25 : vector<8x128xf32>
    %cst_16 = arith.constant dense<0.000000e+00> : vector<128xf32>
    %27 = vector.multi_reduction <add>, %26, %cst_16 [0] : vector<8x128xf32> to vector<128xf32>
    %28 = vector.shape_cast %27 : vector<128xf32> to vector<1x128xf32>
    %29 = vector.broadcast %28 : vector<1x128xf32> to vector<8x128xf32>
    %30 = arith.divf %26, %29 : vector<8x128xf32>
    %c0_17 = arith.constant 0 : index
    %c0_18 = arith.constant 0 : index
    %31 = vector.load %arg3[%c0_17, %c0_18] : memref<8x128xf32, #tpu.memory_space<vmem>>, vector<8x128xf32>
    tpu.vector_store %arg3[%c0_17, %c0_18], %30 {strides = array<i32>} : memref<8x128xf32, #tpu.memory_space<vmem>>, vector<8x128xf32>,
    return
  }
  func.func @transform_0(%arg0: i32) -> (i32, i32) {
    %c0_i32 = arith.constant 0 : i32
    %c0_i32_0 = arith.constant 0 : i32
    return %c0_i32, %arg0 : i32, i32
  }
  func.func @transform_1(%arg0: i32) -> (i32, i32) {
    %c0_i32 = arith.constant 0 : i32
    %c0_i32_0 = arith.constant 0 : i32
    %c0_i32_1 = arith.constant 0 : i32
    return %c0_i32, %c0_i32_0 : i32, i32
  }
  func.func @transform_2(%arg0: i32) -> (i32, i32) {
    %c0_i32 = arith.constant 0 : i32
    %c0_i32_0 = arith.constant 0 : i32
    return %c0_i32, %arg0 : i32, i32
  }
}

</mosaic_0001>

<llo_original>
// kernel: tpu_custom_call.1
$region0: #{tpu_custom_call.1}
  #allocation0 [shape = 'u32[]', space=smem, size = 0x4, offset = 0x4, fixed_abs, tag = 'smem constant byte address 0x4 - core index']
  #allocation1 [shape = 'u32[144,128]{1,0:T(1,128)}', space=vmem, size = 0x12000, scoped, tag = 'internal scratch']
  %s0 = inlined_call_operand.hbm [shape: f32[16,128], index: 0, kind: input, shape index: {}]
  %s1 = inlined_call_operand.hbm [shape: f32[56,128], index: 1, kind: input, shape index: {}]
  %s2 = inlined_call_operand.hbm [shape: f32[8,128], index: 2, kind: output, shape index: {}]
  %s3 = sld [smem:[#allocation0]]
  $region26: #{tpu_custom_call.1} parent=0
    _
  %s5 = ssub.s32 1, %s3
  %s6 = scalar_select 0, %s5, %s3
  $region1: #{tpu_custom_call.1} parent=0
    #allocation2 [shape = 'u8[8192]{0}', space=vmem, size = 0x2000, scoped, tag = 'input window, operand 0, single buffered']
    #allocation3 [shape = 's32[1]{0}', space=sflag, size = 0x4, scoped, tag = 'scoped memory for tpu_custom_call.1']
    #allocation4 [shape = 's32[1]{0}', space=sflag, size = 0x4, scoped, tag = 'scoped memory for tpu_custom_call.1']
    #allocation5 [shape = 'u8[28672]{0}', space=vmem, size = 0x7000, scoped, tag = 'input window, operand 1, single buffered']
    #allocation6 [shape = 's32[1]{0}', space=sflag, size = 0x4, scoped, tag = 'scoped memory for tpu_custom_call.1']
    #allocation7 [shape = 'u8[4096]{0}', space=vmem, size = 0x1000, scoped, tag = 'output window, operand 0, single buffered']
    %7 = vsyncpa [#allocation3], 0
    %8 = vsyncpa [#allocation6], 0
    %9 = vsyncpa [#allocation4], 0
    // Predicated region
    $region2: #{tpu_custom_call.1} parent=1 // pred_check
      _
    $region3: #{tpu_custom_call.1} parent=1 // pred_check_branch
      %11 = sbr.rel (0) target = $region5
    $region4: #{tpu_custom_call.1} parent=1 // pred_region
      %s13 = ssub.s32 256, 256
      %14 = vsyncadd [#allocation3], %s13
      %s15 = sshll.u32 [#allocation2], 4
      %s16 = int_to_ptr.vmem [resolvable:$true] %s15
      %21 = dma.hbm_to_vmem [thread:$0]  %s0, 256, %s16, [#allocation3], 128, 128, 8
    $region5: #{tpu_custom_call.1} parent=1 // pred_fallthru
      _
    // Predicated region
    $region6: #{tpu_custom_call.1} parent=1 // pred_check
      _
    $region7: #{tpu_custom_call.1} parent=1 // pred_check_branch
      %23 = sbr.rel (0) target = $region9
    $region8: #{tpu_custom_call.1} parent=1 // pred_region
      %s25 = ssub.s32 896, 896
      %26 = vsyncadd [#allocation6], %s25
      %s27 = sshll.u32 [#allocation5], 4
      %s28 = int_to_ptr.vmem [resolvable:$true] %s27
      %33 = dma.hbm_to_vmem [thread:$0]  %s1, 896, %s28, [#allocation6], 128, 128, 8
    $region9: #{tpu_custom_call.1} parent=1 // pred_fallthru
      _
    // Predicated region
    $region10: #{tpu_custom_call.1} parent=1 // pred_check
      _
    $region11: #{tpu_custom_call.1} parent=1 // pred_check_branch
      %35 = sbr.rel (0) target = $region13
    $region12: #{tpu_custom_call.1} parent=1 // pred_region
      %36 = dma.done [#allocation3], 256
    $region13: #{tpu_custom_call.1} parent=1 // pred_fallthru
      _
    // Predicated region
    $region14: #{tpu_custom_call.1} parent=1 // pred_check
      _
    $region15: #{tpu_custom_call.1} parent=1 // pred_check_branch
      %38 = sbr.rel (0) target = $region17
    $region16: #{tpu_custom_call.1} parent=1 // pred_region
      %39 = dma.done [#allocation6], 896
    $region17: #{tpu_custom_call.1} parent=1 // pred_fallthru
      _
    %v40 = vld [vmem:[#allocation2] sm:$0xff]
    %v41 = vld [vmem:[#allocation2 + $0x8] sm:$0xff]
    %v42 = vld [vmem:[#allocation5] sm:$0xff]
    %v43 = vld [vmem:[#allocation5 + $0x8] sm:$0xff]
    %v44 = vld [vmem:[#allocation5 + $0x10] sm:$0xff]
    %v45 = vld [vmem:[#allocation5 + $0x18] sm:$0xff]
    %47 = vset.pattern.permute.xlu0 16
    %48 = vperm.xlu0 %47, %v42
    %v49 = vpop.permute.xlu0 %48
    %52 = vset.pattern.permute.xlu0 16
    %53 = vperm.xlu0 %52, %v43
    %v54 = vpop.permute.xlu0 %53
    %57 = vset.pattern.permute.xlu0 16
    %58 = vperm.xlu0 %57, %v44
    %v59 = vpop.permute.xlu0 %58
    %62 = vset.pattern.permute.xlu0 16
    %63 = vperm.xlu0 %62, %v45
    %v64 = vpop.permute.xlu0 %63
    %vm66 = vcmask 130048
    %v67 = vsel %vm66, %v42, 0
    %v69 = vsel %vm66, %v43, 0
    %v71 = vsel %vm66, %v44, 0
    %v73 = vsel %vm66, %v45, 0
    %75 = vmatprep.subr.mxu0 0.0
    %76 = vmatpush1.msra.mxu0 %v40
    %77 = vmatprep.subr.mxu0 0.0
    %78 = vmatpush1.msra.mxu0 %v41
    %79 = vmatprep.subr.mxu0 0.0
    %80 = vmatpush1.msra.mxu0 0.0
    %81 = vmatprep.subr.mxu0 0.0
    %82 = vmatpush1.msra.mxu0 0.0
    %83 = vmatprep.subr.mxu0 0.0
    %84 = vmatpush1.msra.mxu0 0.0
    %85 = vmatprep.subr.mxu0 0.0
    %86 = vmatpush1.msra.mxu0 0.0
    %87 = vmatprep.subr.mxu0 0.0
    %88 = vmatpush1.msra.mxu0 0.0
    %89 = vmatprep.subr.mxu0 0.0
    %90 = vmatpush1.msra.mxu0 0.0
    %91 = vmatprep.subr.mxu0 0.0
    %92 = vmatpush1.msra.mxu0 0.0
    %93 = vmatprep.subr.mxu0 0.0
    %94 = vmatpush1.msra.mxu0 0.0
    %95 = vmatprep.subr.mxu0 0.0
    %96 = vmatpush1.msra.mxu0 0.0
    %97 = vmatprep.subr.mxu0 0.0
    %98 = vmatpush1.msra.mxu0 0.0
    %99 = vmatprep.subr.mxu0 0.0
    %100 = vmatpush1.msra.mxu0 0.0
    %101 = vmatprep.subr.mxu0 0.0
    %102 = vmatpush1.msra.mxu0 0.0
    %103 = vmatprep.subr.mxu0 0.0
    %104 = vmatpush1.msra.mxu0 0.0
    %105 = vmatprep.subr.mxu0 0.0
    %106 = vmatpush1.msra.mxu0 0.0
    %107 = vmatprep.subr.mxu0 0.0
    %108 = vmatpush1.msra.mxu0 0.0
    %109 = vmatprep.subr.mxu0 0.0
    %110 = vmatpush1.msra.mxu0 0.0
    %111 = vmatprep.subr.mxu0 0.0
    %112 = vmatpush1.msra.mxu0 0.0
    %113 = vmatprep.subr.mxu0 0.0
    %114 = vmatpush1.msra.mxu0 0.0
    %115 = vmatprep.subr.mxu0 0.0
    %116 = vmatpush1.msra.mxu0 0.0
    %117 = vmatprep.subr.mxu0 0.0
    %118 = vmatpush1.msra.mxu0 0.0
    %119 = vmatprep.subr.mxu0 0.0
    %120 = vmatpush1.msra.mxu0 0.0
    %121 = vmatprep.subr.mxu0 0.0
    %122 = vmatpush1.msra.mxu0 0.0
    %123 = vmatprep.subr.mxu0 0.0
    %124 = vmatpush1.msra.mxu0 0.0
    %125 = vmatprep.subr.mxu0 0.0
    %126 = vmatpush1.msra.mxu0 0.0
    %127 = vmatprep.subr.mxu0 0.0
    %128 = vmatpush1.msra.mxu0 0.0
    %129 = vmatprep.subr.mxu0 0.0
    %130 = vmatpush1.msra.mxu0 0.0
    %131 = vmatprep.subr.mxu0 0.0
    %132 = vmatpush1.msra.mxu0 0.0
    %133 = vmatprep.subr.mxu0 0.0
    %134 = vmatpush1.msra.mxu0 0.0
    %135 = vmatprep.subr.mxu0 0.0
    %136 = vmatpush1.msra.mxu0 0.0
    %137 = vmatprep.subr.mxu0 0.0
    %138 = vmatpush1.msra.mxu0 0.0
    %139 = vmatprep.mubr.f32.mxu0 0.0
    %140 = vmatmul.mubr.f32.gmra.mrb[0].mxu0 %v67
    %v141 = vpop.f32.mrb[0].mxu0
    %v142 = vadd.f32 %v49, %v141
    %v143 = vpop.f32.mrb[0].mxu0
    %144 = vmatprep.mubr.f32.mxu0 0.0
    %145 = vmatmul.mubr.f32.gmra.mrb[0].mxu0 %v69
    %v146 = vpop.f32.mrb[0].mxu0
    %v147 = vadd.f32 %v54, %v146
    %v148 = vpop.f32.mrb[0].mxu0
    %149 = vmatprep.mubr.f32.mxu0 0.0
    %150 = vmatmul.mubr.f32.gmra.mrb[0].mxu0 %v71
    %v151 = vpop.f32.mrb[0].mxu0
    %v152 = vadd.f32 %v59, %v151
    %v153 = vpop.f32.mrb[0].mxu0
    %154 = vmatprep.mubr.f32.mxu0 0.0
    %155 = vmatmul.mubr.f32.gmra.mrb[0].mxu0 %v73
    %v156 = vpop.f32.mrb[0].mxu0
    %v157 = vadd.f32 %v64, %v156
    %v158 = vpop.f32.mrb[0].mxu0
    %159 = vdwg.mxu0
    %v160 = vmax.f32 %v142, 0.0
    %v161 = vmax.f32 %v147, 0.0
    %v162 = vmax.f32 %v152, 0.0
    %v163 = vmax.f32 %v157, 0.0
    %v164 = vld [vmem:[#allocation5 + $0x20] sm:$0xff]
    %v165 = vld [vmem:[#allocation5 + $0x28] sm:$0xff]
    %167 = vset.pattern.permute.xlu0 32
    %168 = vperm.xlu0 %167, %v164
    %v169 = vpop.permute.xlu0 %168
    %172 = vset.pattern.permute.xlu0 32
    %173 = vperm.xlu0 %172, %v165
    %v174 = vpop.permute.xlu0 %173
    %vm176 = vcmask 261120
    %v177 = vsel %vm176, %v164, 0
    %v179 = vsel %vm176, %v165, 0
    %181 = vmatprep.subr.mxu0 0.0
    %182 = vmatpush1.msra.mxu0 %v160
    %183 = vmatprep.subr.mxu0 0.0
    %184 = vmatpush1.msra.mxu0 %v161
    %185 = vmatprep.subr.mxu0 0.0
    %186 = vmatpush1.msra.mxu0 %v162
    %187 = vmatprep.subr.mxu0 0.0
    %188 = vmatpush1.msra.mxu0 %v163
    %189 = vmatprep.subr.mxu0 0.0
    %190 = vmatpush1.msra.mxu0 0.0
    %191 = vmatprep.subr.mxu0 0.0
    %192 = vmatpush1.msra.mxu0 0.0
    %193 = vmatprep.subr.mxu0 0.0
    %194 = vmatpush1.msra.mxu0 0.0
    %195 = vmatprep.subr.mxu0 0.0
    %196 = vmatpush1.msra.mxu0 0.0
    %197 = vmatprep.subr.mxu0 0.0
    %198 = vmatpush1.msra.mxu0 0.0
    %199 = vmatprep.subr.mxu0 0.0
    %200 = vmatpush1.msra.mxu0 0.0
    %201 = vmatprep.subr.mxu0 0.0
    %202 = vmatpush1.msra.mxu0 0.0
    %203 = vmatprep.subr.mxu0 0.0
    %204 = vmatpush1.msra.mxu0 0.0
    %205 = vmatprep.subr.mxu0 0.0
    %206 = vmatpush1.msra.mxu0 0.0
    %207 = vmatprep.subr.mxu0 0.0
    %208 = vmatpush1.msra.mxu0 0.0
    %209 = vmatprep.subr.mxu0 0.0
    %210 = vmatpush1.msra.mxu0 0.0
    %211 = vmatprep.subr.mxu0 0.0
    %212 = vmatpush1.msra.mxu0 0.0
    %213 = vmatprep.subr.mxu0 0.0
    %214 = vmatpush1.msra.mxu0 0.0
    %215 = vmatprep.subr.mxu0 0.0
    %216 = vmatpush1.msra.mxu0 0.0
    %217 = vmatprep.subr.mxu0 0.0
    %218 = vmatpush1.msra.mxu0 0.0
    %219 = vmatprep.subr.mxu0 0.0
    %220 = vmatpush1.msra.mxu0 0.0
    %221 = vmatprep.subr.mxu0 0.0
    %222 = vmatpush1.msra.mxu0 0.0
    %223 = vmatprep.subr.mxu0 0.0
    %224 = vmatpush1.msra.mxu0 0.0
    %225 = vmatprep.subr.mxu0 0.0
    %226 = vmatpush1.msra.mxu0 0.0
    %227 = vmatprep.subr.mxu0 0.0
    %228 = vmatpush1.msra.mxu0 0.0
    %229 = vmatprep.subr.mxu0 0.0
    %230 = vmatpush1.msra.mxu0 0.0
    %231 = vmatprep.subr.mxu0 0.0
    %232 = vmatpush1.msra.mxu0 0.0
    %233 = vmatprep.subr.mxu0 0.0
    %234 = vmatpush1.msra.mxu0 0.0
    %235 = vmatprep.subr.mxu0 0.0
    %236 = vmatpush1.msra.mxu0 0.0
    %237 = vmatprep.subr.mxu0 0.0
    %238 = vmatpush1.msra.mxu0 0.0
    %239 = vmatprep.subr.mxu0 0.0
    %240 = vmatpush1.msra.mxu0 0.0
    %241 = vmatprep.subr.mxu0 0.0
    %242 = vmatpush1.msra.mxu0 0.0
    %243 = vmatprep.subr.mxu0 0.0
    %244 = vmatpush1.msra.mxu0 0.0
    %245 = vmatprep.mubr.f32.mxu0 0.0
    %246 = vmatmul.mubr.f32.gmra.mrb[0].mxu0 %v177
    %v247 = vpop.f32.mrb[0].mxu0
    %v248 = vadd.f32 %v169, %v247
    %v249 = vpop.f32.mrb[0].mxu0
    %250 = vmatprep.mubr.f32.mxu0 0.0
    %251 = vmatmul.mubr.f32.gmra.mrb[0].mxu0 %v179
    %v252 = vpop.f32.mrb[0].mxu0
    %v253 = vadd.f32 %v174, %v252
    %v254 = vpop.f32.mrb[0].mxu0
    %255 = vdwg.mxu0
    %v256 = vmax.f32 %v248, 0.0
    %v257 = vmax.f32 %v253, 0.0
    %v258 = vld [vmem:[#allocation5 + $0x30] sm:$0xff]
    %260 = vset.pattern.permute.xlu0 16
    %261 = vperm.xlu0 %260, %v258
    %v262 = vpop.permute.xlu0 %261
    %v264 = vsel %vm66, %v258, 0
    %266 = vmatprep.subr.mxu0 0.0
    %267 = vmatpush1.msra.mxu0 %v256
    %268 = vmatprep.subr.mxu0 0.0
    %269 = vmatpush1.msra.mxu0 %v257
    %270 = vmatprep.subr.mxu0 0.0
    %271 = vmatpush1.msra.mxu0 0.0
    %272 = vmatprep.subr.mxu0 0.0
    %273 = vmatpush1.msra.mxu0 0.0
    %274 = vmatprep.subr.mxu0 0.0
    %275 = vmatpush1.msra.mxu0 0.0
    %276 = vmatprep.subr.mxu0 0.0
    %277 = vmatpush1.msra.mxu0 0.0
    %278 = vmatprep.subr.mxu0 0.0
    %279 = vmatpush1.msra.mxu0 0.0
    %280 = vmatprep.subr.mxu0 0.0
    %281 = vmatpush1.msra.mxu0 0.0
    %282 = vmatprep.subr.mxu0 0.0
    %283 = vmatpush1.msra.mxu0 0.0
    %284 = vmatprep.subr.mxu0 0.0
    %285 = vmatpush1.msra.mxu0 0.0
    %286 = vmatprep.subr.mxu0 0.0
    %287 = vmatpush1.msra.mxu0 0.0
    %288 = vmatprep.subr.mxu0 0.0
    %289 = vmatpush1.msra.mxu0 0.0
    %290 = vmatprep.subr.mxu0 0.0
    %291 = vmatpush1.msra.mxu0 0.0
    %292 = vmatprep.subr.mxu0 0.0
    %293 = vmatpush1.msra.mxu0 0.0
    %294 = vmatprep.subr.mxu0 0.0
    %295 = vmatpush1.msra.mxu0 0.0
    %296 = vmatprep.subr.mxu0 0.0
    %297 = vmatpush1.msra.mxu0 0.0
    %298 = vmatprep.subr.mxu0 0.0
    %299 = vmatpush1.msra.mxu0 0.0
    %300 = vmatprep.subr.mxu0 0.0
    %301 = vmatpush1.msra.mxu0 0.0
    %302 = vmatprep.subr.mxu0 0.0
    %303 = vmatpush1.msra.mxu0 0.0
    %304 = vmatprep.subr.mxu0 0.0
    %305 = vmatpush1.msra.mxu0 0.0
    %306 = vmatprep.subr.mxu0 0.0
    %307 = vmatpush1.msra.mxu0 0.0
    %308 = vmatprep.subr.mxu0 0.0
    %309 = vmatpush1.msra.mxu0 0.0
    %310 = vmatprep.subr.mxu0 0.0
    %311 = vmatpush1.msra.mxu0 0.0
    %312 = vmatprep.subr.mxu0 0.0
    %313 = vmatpush1.msra.mxu0 0.0
    %314 = vmatprep.subr.mxu0 0.0
    %315 = vmatpush1.msra.mxu0 0.0
    %316 = vmatprep.subr.mxu0 0.0
    %317 = vmatpush1.msra.mxu0 0.0
    %318 = vmatprep.subr.mxu0 0.0
    %319 = vmatpush1.msra.mxu0 0.0
    %320 = vmatprep.subr.mxu0 0.0
    %321 = vmatpush1.msra.mxu0 0.0
    %322 = vmatprep.subr.mxu0 0.0
    %323 = vmatpush1.msra.mxu0 0.0
    %324 = vmatprep.subr.mxu0 0.0
    %325 = vmatpush1.msra.mxu0 0.0
    %326 = vmatprep.subr.mxu0 0.0
    %327 = vmatpush1.msra.mxu0 0.0
    %328 = vmatprep.subr.mxu0 0.0
    %329 = vmatpush1.msra.mxu0 0.0
    %330 = vmatprep.mubr.f32.mxu0 0.0
    %331 = vmatmul.mubr.f32.gmra.mrb[0].mxu0 %v264
    %v332 = vpop.f32.mrb[0].mxu0
    %v333 = vadd.f32 %v262, %v332
    %v334 = vpop.f32.mrb[0].mxu0
    %335 = vdwg.mxu0
    %v336 = vmax.f32 %v333, 0.0
    %v337 = vrot.slane %v336, 4
    %v338 = vmax.f32 %v336, %v337
    %v339 = vrot.slane %v338, 2
    %v340 = vmax.f32 %v338, %v339
    %v341 = vrot.slane %v340, 1
    %v342 = vmax.f32 %v340, %v341
    %v343 = vsub.f32 %v336, %v342
    %v344 = vmul.f32 %v343, 1.442695
    %v345 = vpow.pop %v344
    %v346 = vrot.slane %v345, 4
    %v347 = vadd.f32 %v345, %v346
    %v348 = vrot.slane %v347, 2
    %v349 = vadd.f32 %v347, %v348
    %v350 = vrot.slane %v349, 1
    %v351 = vadd.f32 %v349, %v350
    %v352 = vrcp.pop %v351
    %v353 = vmul.f32 %v345, %v352
    %354 = vst [vmem:[#allocation7] sm:$0xff] %v353
    // Predicated region
    $region18: #{tpu_custom_call.1} parent=1 // pred_check
      _
    $region19: #{tpu_custom_call.1} parent=1 // pred_check_branch
      %356 = sbr.rel (0) target = $region21
    $region20: #{tpu_custom_call.1} parent=1 // pred_region
      %s358 = ssub.s32 128, 128
      %359 = vsyncadd [#allocation4], %s358
      %s361 = sshll.u32 [#allocation7], 4
      %s362 = int_to_ptr.vmem [resolvable:$true] %s361
      %364 = dma.vmem_to_hbm [thread:$0]  %s362, 128, %s2, [#allocation4]
    $region21: #{tpu_custom_call.1} parent=1 // pred_fallthru
      _
    // Predicated region
    $region22: #{tpu_custom_call.1} parent=1 // pred_check
      _
    $region23: #{tpu_custom_call.1} parent=1 // pred_check_branch
      %366 = sbr.rel (0) target = $region25
    $region24: #{tpu_custom_call.1} parent=1 // pred_region
      %367 = dma.done [#allocation4], 128
    $region25: #{tpu_custom_call.1} parent=1 // pred_fallthru
      _
    %368 = vsyncpa [#allocation3], 1
    %369 = vsyncpa [#allocation6], 1
    %370 = vsyncpa [#allocation4], 1

</llo_original>
